<compile_context>
chip_gen: v5e
topology: v5e:2x2
jax: 0.10.0
libtpu: 0.0.40
codegen_flags: <defaults>
</compile_context>

<pallas_src>
import jax
import jax.numpy as jnp
from jax import lax
from jax.experimental import pallas as pl
from jax.experimental.pallas import tpu as pltpu


def gru_fc_softmax_kernel(gi_ref, whh_ref, bhn_ref, wfc_ref, bfc_ref,
                          probs_ref, hid_ref):
    """gi_ref: (T, B, 3H) precomputed x@W_ih^T + b_ih + [b_hh_r | b_hh_z | 0].
    whh_ref: (H, 3H), bhn_ref: (1, H) = b_hh[2H:3H], wfc_ref: (H, O), bfc_ref: (1, O).
    Gate order along 3H is r | z | n (PyTorch convention)."""
    T, B, _ = gi_ref.shape
    H = whh_ref.shape[0]

    whh = whh_ref[...]                                   # (H, 3H) stays resident
    bhn = jnp.broadcast_to(bhn_ref[...], (B, H))         # hoisted broadcast

    def step(t, h):
        gi = gi_ref[t]                                   # (B, 3H) — lane-dense load
        gh = jnp.dot(h, whh, preferred_element_type=jnp.float32)   # (B, 3H)
        # fused r/z activation over contiguous first 2H lanes
        rz = jax.nn.sigmoid(gi[:, :2 * H] + gh[:, :2 * H])
        r = rz[:, :H]
        z = rz[:, H:2 * H]
        # PyTorch GRU: n = tanh(W_in x + b_in + r * (W_hn h + b_hn))
        n = jnp.tanh(gi[:, 2 * H:] + r * (gh[:, 2 * H:] + bhn))
        return (1.0 - z) * n + z * h

    h0 = jnp.zeros((B, H), jnp.float32)
    h = lax.fori_loop(0, T, step, h0, unroll=True)       # T is static & small

    # fc on last hidden state + softmax (exact reciprocal to hold 1e-5 tol)
    logits = jnp.dot(h, wfc_ref[...], preferred_element_type=jnp.float32) + bfc_ref[...]
    m = jnp.max(logits, axis=-1, keepdims=True)
    e = jnp.exp(logits - m)
    probs = e * pl.reciprocal(jnp.sum(e, axis=-1, keepdims=True), approx=False)

    probs_ref[...] = probs
    hid_ref[...] = h


def rnn_model_forward(x, params):
    """x: (B, T, I) float32 (batch_first, like PyTorch).
    Returns (softmax_probs (B, O), hidden (1, B, H)) matching RNNModel.forward."""
    B, T, I = x.shape
    H = params["w_hh"].shape[1]
    O = params["w_fc"].shape[0]

    x_tm = jnp.transpose(x, (1, 0, 2)).astype(jnp.float32)        # (T, B, I)
    wih_t = params["w_ih"].T.astype(jnp.float32)                  # (I, 3H)
    whh_t = params["w_hh"].T.astype(jnp.float32)                  # (H, 3H)

    # Hoisted input projection with folded biases:
    #   gi_all[t] = x_t @ W_ih^T + b_ih + [b_hh_r | b_hh_z | 0]
    bias_fold = params["b_ih"] + jnp.concatenate(
        [params["b_hh"][:2 * H], jnp.zeros((H,), jnp.float32)])
    gi_all = jnp.einsum("tbi,ih->tbh", x_tm, wih_t,
                        preferred_element_type=jnp.float32) + bias_fold  # (T, B, 3H)

    bhn = params["b_hh"][2 * H:].reshape(1, H)                    # (1, H)
    wfc_t = params["w_fc"].T.astype(jnp.float32)                  # (H, O)
    bfc = params["b_fc"].reshape(1, O)

    vmem = pl.BlockSpec(memory_space=pltpu.MemorySpace.VMEM)
    probs, h_last = pl.pallas_call(
        gru_fc_softmax_kernel,
        out_shape=(jax.ShapeDtypeStruct((B, O), jnp.float32),
                   jax.ShapeDtypeStruct((B, H), jnp.float32)),
        in_specs=[vmem] * 5,
        out_specs=(vmem, vmem),
    )(gi_all, whh_t, bhn, wfc_t, bfc)

    return probs, h_last[None]   # hidden has PyTorch shape (num_layers=1, B, H)


def rnn_model_reference(x, params):
    """Pure-JAX reference for correctness checking (same semantics as nn.GRU)."""
    B, T, I = x.shape
    H = params["w_hh"].shape[1]
    wih, whh = params["w_ih"], params["w_hh"]
    bih, bhh = params["b_ih"], params["b_hh"]
    h = jnp.zeros((B, H), jnp.float32)
    for t in range(T):
        x_t = x[:, t, :]
        gi = x_t @ wih.T + bih
        gh = h @ whh.T + bhh
        r = jax.nn.sigmoid(gi[:, 0:H] + gh[:, 0:H])
        z = jax.nn.sigmoid(gi[:, H:2 * H] + gh[:, H:2 * H])
        n = jnp.tanh(gi[:, 2 * H:3 * H] + r * gh[:, 2 * H:3 * H])
        h = (1.0 - z) * n + z * h
    logits = h @ params["w_fc"].T + params["b_fc"]
    return jax.nn.softmax(logits, axis=-1), h[None]


def init_params(key, input_size, hidden_size, output_size):
    """Deterministic init mirroring PyTorch default U(-1/sqrt(fan), 1/sqrt(fan))."""
    ks = jax.random.split(key, 6)
    kg = 1.0 / jnp.sqrt(hidden_size)
    kf = 1.0 / jnp.sqrt(hidden_size)
    u = lambda k, shape, s: jax.random.uniform(k, shape, jnp.float32, -s, s)
    return {
        "w_ih": u(ks[0], (3 * hidden_size, input_size), kg),
        "w_hh": u(ks[1], (3 * hidden_size, hidden_size), kg),
        "b_ih": u(ks[2], (3 * hidden_size,), kg),
        "b_hh": u(ks[3], (3 * hidden_size,), kg),
        "w_fc": u(ks[4], (output_size, hidden_size), kf),
        "b_fc": u(ks[5], (output_size,), kf),
    }


if __name__ == "__main__":
    input_size, hidden_size, output_size = 9, 128, 4
    batch, seq = 2, 8

    key = jax.random.PRNGKey(0)
    k_param, k_x = jax.random.split(key)
    params = init_params(k_param, input_size, hidden_size, output_size)
    x = jax.random.normal(k_x, (batch, seq, input_size), jnp.float32)

    probs, hidden = rnn_model_forward(x, params)
    probs = jax.block_until_ready(probs)
    hidden = jax.block_until_ready(hidden)

    probs_ref, hidden_ref = rnn_model_reference(x, params)
    assert probs.shape == (batch, output_size)
    assert hidden.shape == (1, batch, hidden_size)
    assert jnp.allclose(probs, probs_ref, atol=1e-5, rtol=1e-5)
    assert jnp.allclose(hidden, hidden_ref, atol=1e-5, rtol=1e-5)
    assert jnp.allclose(jnp.sum(probs, axis=-1), 1.0, atol=1e-5)

    print("KERNEL_OK")
</pallas_src>

<mosaic_0001>
module attributes {stable_mosaic.version = 11 : i64} {
  func.func @gru_fc_softmax_kernel(%arg0: memref<8x2x384xf32, #tpu.memory_space<vmem>>, %arg1: memref<128x384xf32, #tpu.memory_space<vmem>>, %arg2: memref<1x128xf32, #tpu.memory_space<vmem>>, %arg3: memref<128x4xf32, #tpu.memory_space<vmem>>, %arg4: memref<1x4xf32, #tpu.memory_space<vmem>>, %arg5: memref<2x4xf32, #tpu.memory_space<vmem>>, %arg6: memref<2x128xf32, #tpu.memory_space<vmem>>) attributes {dimension_semantics = [], scalar_prefetch = 0 : i64, scratch_operands = 0 : i64, tpu.core_type = #tpu.core_type<tc>} {
    %c0 = arith.constant 0 : index
    %c0_0 = arith.constant 0 : index
    %0 = vector.load %arg1[%c0, %c0_0] : memref<128x384xf32, #tpu.memory_space<vmem>>, vector<128x384xf32>
    %c0_1 = arith.constant 0 : index
    %c0_2 = arith.constant 0 : index
    %1 = vector.load %arg2[%c0_1, %c0_2] : memref<1x128xf32, #tpu.memory_space<vmem>>, vector<1x128xf32>
    %2 = vector.shape_cast %1 : vector<1x128xf32> to vector<1x128xf32>
    %3 = vector.broadcast %2 : vector<1x128xf32> to vector<2x128xf32>
    %cst = arith.constant 0.000000e+00 : f32
    %4 = vector.broadcast %cst : f32 to vector<2x128xf32>
    %c0_i32 = arith.constant 0 : i32
    %5 = arith.index_cast %c0_i32 : i32 to index
    %c0_3 = arith.constant 0 : index
    %c0_4 = arith.constant 0 : index
    %6 = vector.load %arg0[%5, %c0_3, %c0_4] : memref<8x2x384xf32, #tpu.memory_space<vmem>>, vector<1x2x384xf32>
    %7 = vector.shape_cast %6 : vector<1x2x384xf32> to vector<2x384xf32>
    %cst_5 = arith.constant dense<0.000000e+00> : vector<2x384xf32>
    %8 = tpu.matmul %4, %0, %cst_5 {dimension_numbers = #tpu.dot_dimension_numbers<[1], [0], [0], [1], [0, 0, 1, 1], [], []>} : vector<2x128xf32>, vector<128x384xf32>, vector<2x384xf32> -> vector<2x384xf32>
    %9 = vector.extract_strided_slice %7 {offsets = [0, 0], sizes = [2, 256], strides = [1, 1]} : vector<2x384xf32> to vector<2x256xf32>
    %10 = vector.extract_strided_slice %8 {offsets = [0, 0], sizes = [2, 256], strides = [1, 1]} : vector<2x384xf32> to vector<2x256xf32>
    %11 = arith.addf %9, %10 : vector<2x256xf32>
    %12 = arith.negf %11 : vector<2x256xf32>
    %13 = math.exp %12 : vector<2x256xf32>
    %cst_6 = arith.constant 1.000000e+00 : f32
    %14 = vector.broadcast %cst_6 : f32 to vector<2x256xf32>
    %15 = arith.addf %14, %13 : vector<2x256xf32>
    %16 = arith.divf %14, %15 : vector<2x256xf32>
    %17 = vector.extract_strided_slice %16 {offsets = [0, 0], sizes = [2, 128], strides = [1, 1]} : vector<2x256xf32> to vector<2x128xf32>
    %18 = vector.extract_strided_slice %16 {offsets = [0, 128], sizes = [2, 128], strides = [1, 1]} : vector<2x256xf32> to vector<2x128xf32>
    %19 = vector.extract_strided_slice %7 {offsets = [0, 256], sizes = [2, 128], strides = [1, 1]} : vector<2x384xf32> to vector<2x128xf32>
    %20 = vector.extract_strided_slice %8 {offsets = [0, 256], sizes = [2, 128], strides = [1, 1]} : vector<2x384xf32> to vector<2x128xf32>
    %21 = arith.addf %20, %3 : vector<2x128xf32>
    %22 = arith.mulf %17, %21 : vector<2x128xf32>
    %23 = arith.addf %19, %22 : vector<2x128xf32>
    %24 = math.tanh %23 : vector<2x128xf32>
    %cst_7 = arith.constant 1.000000e+00 : f32
    %25 = vector.broadcast %cst_7 : f32 to vector<2x128xf32>
    %26 = arith.subf %25, %18 : vector<2x128xf32>
    %27 = arith.mulf %26, %24 : vector<2x128xf32>
    %28 = arith.mulf %18, %4 : vector<2x128xf32>
    %29 = arith.addf %27, %28 : vector<2x128xf32>
    %c1_i32 = arith.constant 1 : i32
    %30 = arith.index_cast %c1_i32 : i32 to index
    %c0_8 = arith.constant 0 : index
    %c0_9 = arith.constant 0 : index
    %31 = vector.load %arg0[%30, %c0_8, %c0_9] : memref<8x2x384xf32, #tpu.memory_space<vmem>>, vector<1x2x384xf32>
    %32 = vector.shape_cast %31 : vector<1x2x384xf32> to vector<2x384xf32>
    %cst_10 = arith.constant dense<0.000000e+00> : vector<2x384xf32>
    %33 = tpu.matmul %29, %0, %cst_10 {dimension_numbers = #tpu.dot_dimension_numbers<[1], [0], [0], [1], [0, 0, 1, 1], [], []>} : vector<2x128xf32>, vector<128x384xf32>, vector<2x384xf32> -> vector<2x384xf32>
    %34 = vector.extract_strided_slice %32 {offsets = [0, 0], sizes = [2, 256], strides = [1, 1]} : vector<2x384xf32> to vector<2x256xf32>
    %35 = vector.extract_strided_slice %33 {offsets = [0, 0], sizes = [2, 256], strides = [1, 1]} : vector<2x384xf32> to vector<2x256xf32>
    %36 = arith.addf %34, %35 : vector<2x256xf32>
    %37 = arith.negf %36 : vector<2x256xf32>
    %38 = math.exp %37 : vector<2x256xf32>
    %cst_11 = arith.constant 1.000000e+00 : f32
    %39 = vector.broadcast %cst_11 : f32 to vector<2x256xf32>
    %40 = arith.addf %39, %38 : vector<2x256xf32>
    %41 = arith.divf %39, %40 : vector<2x256xf32>
    %42 = vector.extract_strided_slice %41 {offsets = [0, 0], sizes = [2, 128], strides = [1, 1]} : vector<2x256xf32> to vector<2x128xf32>
    %43 = vector.extract_strided_slice %41 {offsets = [0, 128], sizes = [2, 128], strides = [1, 1]} : vector<2x256xf32> to vector<2x128xf32>
    %44 = vector.extract_strided_slice %32 {offsets = [0, 256], sizes = [2, 128], strides = [1, 1]} : vector<2x384xf32> to vector<2x128xf32>
    %45 = vector.extract_strided_slice %33 {offsets = [0, 256], sizes = [2, 128], strides = [1, 1]} : vector<2x384xf32> to vector<2x128xf32>
    %46 = arith.addf %45, %3 : vector<2x128xf32>
    %47 = arith.mulf %42, %46 : vector<2x128xf32>
    %48 = arith.addf %44, %47 : vector<2x128xf32>
    %49 = math.tanh %48 : vector<2x128xf32>
    %cst_12 = arith.constant 1.000000e+00 : f32
    %50 = vector.broadcast %cst_12 : f32 to vector<2x128xf32>
    %51 = arith.subf %50, %43 : vector<2x128xf32>
    %52 = arith.mulf %51, %49 : vector<2x128xf32>
    %53 = arith.mulf %43, %29 : vector<2x128xf32>
    %54 = arith.addf %52, %53 : vector<2x128xf32>
    %c2_i32 = arith.constant 2 : i32
    %55 = arith.index_cast %c2_i32 : i32 to index
    %c0_13 = arith.constant 0 : index
    %c0_14 = arith.constant 0 : index
    %56 = vector.load %arg0[%55, %c0_13, %c0_14] : memref<8x2x384xf32, #tpu.memory_space<vmem>>, vector<1x2x384xf32>
    %57 = vector.shape_cast %56 : vector<1x2x384xf32> to vector<2x384xf32>
    %cst_15 = arith.constant dense<0.000000e+00> : vector<2x384xf32>
    %58 = tpu.matmul %54, %0, %cst_15 {dimension_numbers = #tpu.dot_dimension_numbers<[1], [0], [0], [1], [0, 0, 1, 1], [], []>} : vector<2x128xf32>, vector<128x384xf32>, vector<2x384xf32> -> vector<2x384xf32>
    %59 = vector.extract_strided_slice %57 {offsets = [0, 0], sizes = [2, 256], strides = [1, 1]} : vector<2x384xf32> to vector<2x256xf32>
    %60 = vector.extract_strided_slice %58 {offsets = [0, 0], sizes = [2, 256], strides = [1, 1]} : vector<2x384xf32> to vector<2x256xf32>
    %61 = arith.addf %59, %60 : vector<2x256xf32>
    %62 = arith.negf %61 : vector<2x256xf32>
    %63 = math.exp %62 : vector<2x256xf32>
    %cst_16 = arith.constant 1.000000e+00 : f32
    %64 = vector.broadcast %cst_16 : f32 to vector<2x256xf32>
    %65 = arith.addf %64, %63 : vector<2x256xf32>
    %66 = arith.divf %64, %65 : vector<2x256xf32>
    %67 = vector.extract_strided_slice %66 {offsets = [0, 0], sizes = [2, 128], strides = [1, 1]} : vector<2x256xf32> to vector<2x128xf32>
    %68 = vector.extract_strided_slice %66 {offsets = [0, 128], sizes = [2, 128], strides = [1, 1]} : vector<2x256xf32> to vector<2x128xf32>
    %69 = vector.extract_strided_slice %57 {offsets = [0, 256], sizes = [2, 128], strides = [1, 1]} : vector<2x384xf32> to vector<2x128xf32>
    %70 = vector.extract_strided_slice %58 {offsets = [0, 256], sizes = [2, 128], strides = [1, 1]} : vector<2x384xf32> to vector<2x128xf32>
    %71 = arith.addf %70, %3 : vector<2x128xf32>
    %72 = arith.mulf %67, %71 : vector<2x128xf32>
    %73 = arith.addf %69, %72 : vector<2x128xf32>
    %74 = math.tanh %73 : vector<2x128xf32>
    %cst_17 = arith.constant 1.000000e+00 : f32
    %75 = vector.broadcast %cst_17 : f32 to vector<2x128xf32>
    %76 = arith.subf %75, %68 : vector<2x128xf32>
    %77 = arith.mulf %76, %74 : vector<2x128xf32>
    %78 = arith.mulf %68, %54 : vector<2x128xf32>
    %79 = arith.addf %77, %78 : vector<2x128xf32>
    %c3_i32 = arith.constant 3 : i32
    %80 = arith.index_cast %c3_i32 : i32 to index
    %c0_18 = arith.constant 0 : index
    %c0_19 = arith.constant 0 : index
    %81 = vector.load %arg0[%80, %c0_18, %c0_19] : memref<8x2x384xf32, #tpu.memory_space<vmem>>, vector<1x2x384xf32>
    %82 = vector.shape_cast %81 : vector<1x2x384xf32> to vector<2x384xf32>
    %cst_20 = arith.constant dense<0.000000e+00> : vector<2x384xf32>
    %83 = tpu.matmul %79, %0, %cst_20 {dimension_numbers = #tpu.dot_dimension_numbers<[1], [0], [0], [1], [0, 0, 1, 1], [], []>} : vector<2x128xf32>, vector<128x384xf32>, vector<2x384xf32> -> vector<2x384xf32>
    %84 = vector.extract_strided_slice %82 {offsets = [0, 0], sizes = [2, 256], strides = [1, 1]} : vector<2x384xf32> to vector<2x256xf32>
    %85 = vector.extract_strided_slice %83 {offsets = [0, 0], sizes = [2, 256], strides = [1, 1]} : vector<2x384xf32> to vector<2x256xf32>
    %86 = arith.addf %84, %85 : vector<2x256xf32>
    %87 = arith.negf %86 : vector<2x256xf32>
    %88 = math.exp %87 : vector<2x256xf32>
    %cst_21 = arith.constant 1.000000e+00 : f32
    %89 = vector.broadcast %cst_21 : f32 to vector<2x256xf32>
    %90 = arith.addf %89, %88 : vector<2x256xf32>
    %91 = arith.divf %89, %90 : vector<2x256xf32>
    %92 = vector.extract_strided_slice %91 {offsets = [0, 0], sizes = [2, 128], strides = [1, 1]} : vector<2x256xf32> to vector<2x128xf32>
    %93 = vector.extract_strided_slice %91 {offsets = [0, 128], sizes = [2, 128], strides = [1, 1]} : vector<2x256xf32> to vector<2x128xf32>
    %94 = vector.extract_strided_slice %82 {offsets = [0, 256], sizes = [2, 128], strides = [1, 1]} : vector<2x384xf32> to vector<2x128xf32>
    %95 = vector.extract_strided_slice %83 {offsets = [0, 256], sizes = [2, 128], strides = [1, 1]} : vector<2x384xf32> to vector<2x128xf32>
    %96 = arith.addf %95, %3 : vector<2x128xf32>
    %97 = arith.mulf %92, %96 : vector<2x128xf32>
    %98 = arith.addf %94, %97 : vector<2x128xf32>
    %99 = math.tanh %98 : vector<2x128xf32>
    %cst_22 = arith.constant 1.000000e+00 : f32
    %100 = vector.broadcast %cst_22 : f32 to vector<2x128xf32>
    %101 = arith.subf %100, %93 : vector<2x128xf32>
    %102 = arith.mulf %101, %99 : vector<2x128xf32>
    %103 = arith.mulf %93, %79 : vector<2x128xf32>
    %104 = arith.addf %102, %103 : vector<2x128xf32>
    %c4_i32 = arith.constant 4 : i32
    %105 = arith.index_cast %c4_i32 : i32 to index
    %c0_23 = arith.constant 0 : index
    %c0_24 = arith.constant 0 : index
    %106 = vector.load %arg0[%105, %c0_23, %c0_24] : memref<8x2x384xf32, #tpu.memory_space<vmem>>, vector<1x2x384xf32>
    %107 = vector.shape_cast %106 : vector<1x2x384xf32> to vector<2x384xf32>
    %cst_25 = arith.constant dense<0.000000e+00> : vector<2x384xf32>
    %108 = tpu.matmul %104, %0, %cst_25 {dimension_numbers = #tpu.dot_dimension_numbers<[1], [0], [0], [1], [0, 0, 1, 1], [], []>} : vector<2x128xf32>, vector<128x384xf32>, vector<2x384xf32> -> vector<2x384xf32>
    %109 = vector.extract_strided_slice %107 {offsets = [0, 0], sizes = [2, 256], strides = [1, 1]} : vector<2x384xf32> to vector<2x256xf32>
    %110 = vector.extract_strided_slice %108 {offsets = [0, 0], sizes = [2, 256], strides = [1, 1]} : vector<2x384xf32> to vector<2x256xf32>
    %111 = arith.addf %109, %110 : vector<2x256xf32>
    %112 = arith.negf %111 : vector<2x256xf32>
    %113 = math.exp %112 : vector<2x256xf32>
    %cst_26 = arith.constant 1.000000e+00 : f32
    %114 = vector.broadcast %cst_26 : f32 to vector<2x256xf32>
    %115 = arith.addf %114, %113 : vector<2x256xf32>
    %116 = arith.divf %114, %115 : vector<2x256xf32>
    %117 = vector.extract_strided_slice %116 {offsets = [0, 0], sizes = [2, 128], strides = [1, 1]} : vector<2x256xf32> to vector<2x128xf32>
    %118 = vector.extract_strided_slice %116 {offsets = [0, 128], sizes = [2, 128], strides = [1, 1]} : vector<2x256xf32> to vector<2x128xf32>
    %119 = vector.extract_strided_slice %107 {offsets = [0, 256], sizes = [2, 128], strides = [1, 1]} : vector<2x384xf32> to vector<2x128xf32>
    %120 = vector.extract_strided_slice %108 {offsets = [0, 256], sizes = [2, 128], strides = [1, 1]} : vector<2x384xf32> to vector<2x128xf32>
    %121 = arith.addf %120, %3 : vector<2x128xf32>
    %122 = arith.mulf %117, %121 : vector<2x128xf32>
    %123 = arith.addf %119, %122 : vector<2x128xf32>
    %124 = math.tanh %123 : vector<2x128xf32>
    %cst_27 = arith.constant 1.000000e+00 : f32
    %125 = vector.broadcast %cst_27 : f32 to vector<2x128xf32>
    %126 = arith.subf %125, %118 : vector<2x128xf32>
    %127 = arith.mulf %126, %124 : vector<2x128xf32>
    %128 = arith.mulf %118, %104 : vector<2x128xf32>
    %129 = arith.addf %127, %128 : vector<2x128xf32>
    %c5_i32 = arith.constant 5 : i32
    %130 = arith.index_cast %c5_i32 : i32 to index
    %c0_28 = arith.constant 0 : index
    %c0_29 = arith.constant 0 : index
    %131 = vector.load %arg0[%130, %c0_28, %c0_29] : memref<8x2x384xf32, #tpu.memory_space<vmem>>, vector<1x2x384xf32>
    %132 = vector.shape_cast %131 : vector<1x2x384xf32> to vector<2x384xf32>
    %cst_30 = arith.constant dense<0.000000e+00> : vector<2x384xf32>
    %133 = tpu.matmul %129, %0, %cst_30 {dimension_numbers = #tpu.dot_dimension_numbers<[1], [0], [0], [1], [0, 0, 1, 1], [], []>} : vector<2x128xf32>, vector<128x384xf32>, vector<2x384xf32> -> vector<2x384xf32>
    %134 = vector.extract_strided_slice %132 {offsets = [0, 0], sizes = [2, 256], strides = [1, 1]} : vector<2x384xf32> to vector<2x256xf32>
    %135 = vector.extract_strided_slice %133 {offsets = [0, 0], sizes = [2, 256], strides = [1, 1]} : vector<2x384xf32> to vector<2x256xf32>
    %136 = arith.addf %134, %135 : vector<2x256xf32>
    %137 = arith.negf %136 : vector<2x256xf32>
    %138 = math.exp %137 : vector<2x256xf32>
    %cst_31 = arith.constant 1.000000e+00 : f32
    %139 = vector.broadcast %cst_31 : f32 to vector<2x256xf32>
    %140 = arith.addf %139, %138 : vector<2x256xf32>
    %141 = arith.divf %139, %140 : vector<2x256xf32>
    %142 = vector.extract_strided_slice %141 {offsets = [0, 0], sizes = [2, 128], strides = [1, 1]} : vector<2x256xf32> to vector<2x128xf32>
    %143 = vector.extract_strided_slice %141 {offsets = [0, 128], sizes = [2, 128], strides = [1, 1]} : vector<2x256xf32> to vector<2x128xf32>
    %144 = vector.extract_strided_slice %132 {offsets = [0, 256], sizes = [2, 128], strides = [1, 1]} : vector<2x384xf32> to vector<2x128xf32>
    %145 = vector.extract_strided_slice %133 {offsets = [0, 256], sizes = [2, 128], strides = [1, 1]} : vector<2x384xf32> to vector<2x128xf32>
    %146 = arith.addf %145, %3 : vector<2x128xf32>
    %147 = arith.mulf %142, %146 : vector<2x128xf32>
    %148 = arith.addf %144, %147 : vector<2x128xf32>
    %149 = math.tanh %148 : vector<2x128xf32>
    %cst_32 = arith.constant 1.000000e+00 : f32
    %150 = vector.broadcast %cst_32 : f32 to vector<2x128xf32>
    %151 = arith.subf %150, %143 : vector<2x128xf32>
    %152 = arith.mulf %151, %149 : vector<2x128xf32>
    %153 = arith.mulf %143, %129 : vector<2x128xf32>
    %154 = arith.addf %152, %153 : vector<2x128xf32>
    %c6_i32 = arith.constant 6 : i32
    %155 = arith.index_cast %c6_i32 : i32 to index
    %c0_33 = arith.constant 0 : index
    %c0_34 = arith.constant 0 : index
    %156 = vector.load %arg0[%155, %c0_33, %c0_34] : memref<8x2x384xf32, #tpu.memory_space<vmem>>, vector<1x2x384xf32>
    %157 = vector.shape_cast %156 : vector<1x2x384xf32> to vector<2x384xf32>
    %cst_35 = arith.constant dense<0.000000e+00> : vector<2x384xf32>
    %158 = tpu.matmul %154, %0, %cst_35 {dimension_numbers = #tpu.dot_dimension_numbers<[1], [0], [0], [1], [0, 0, 1, 1], [], []>} : vector<2x128xf32>, vector<128x384xf32>, vector<2x384xf32> -> vector<2x384xf32>
    %159 = vector.extract_strided_slice %157 {offsets = [0, 0], sizes = [2, 256], strides = [1, 1]} : vector<2x384xf32> to vector<2x256xf32>
    %160 = vector.extract_strided_slice %158 {offsets = [0, 0], sizes = [2, 256], strides = [1, 1]} : vector<2x384xf32> to vector<2x256xf32>
    %161 = arith.addf %159, %160 : vector<2x256xf32>
    %162 = arith.negf %161 : vector<2x256xf32>
    %163 = math.exp %162 : vector<2x256xf32>
    %cst_36 = arith.constant 1.000000e+00 : f32
    %164 = vector.broadcast %cst_36 : f32 to vector<2x256xf32>
    %165 = arith.addf %164, %163 : vector<2x256xf32>
    %166 = arith.divf %164, %165 : vector<2x256xf32>
    %167 = vector.extract_strided_slice %166 {offsets = [0, 0], sizes = [2, 128], strides = [1, 1]} : vector<2x256xf32> to vector<2x128xf32>
    %168 = vector.extract_strided_slice %166 {offsets = [0, 128], sizes = [2, 128], strides = [1, 1]} : vector<2x256xf32> to vector<2x128xf32>
    %169 = vector.extract_strided_slice %157 {offsets = [0, 256], sizes = [2, 128], strides = [1, 1]} : vector<2x384xf32> to vector<2x128xf32>
    %170 = vector.extract_strided_slice %158 {offsets = [0, 256], sizes = [2, 128], strides = [1, 1]} : vector<2x384xf32> to vector<2x128xf32>
    %171 = arith.addf %170, %3 : vector<2x128xf32>
    %172 = arith.mulf %167, %171 : vector<2x128xf32>
    %173 = arith.addf %169, %172 : vector<2x128xf32>
    %174 = math.tanh %173 : vector<2x128xf32>
    %cst_37 = arith.constant 1.000000e+00 : f32
    %175 = vector.broadcast %cst_37 : f32 to vector<2x128xf32>
    %176 = arith.subf %175, %168 : vector<2x128xf32>
    %177 = arith.mulf %176, %174 : vector<2x128xf32>
    %178 = arith.mulf %168, %154 : vector<2x128xf32>
    %179 = arith.addf %177, %178 : vector<2x128xf32>
    %c7_i32 = arith.constant 7 : i32
    %180 = arith.index_cast %c7_i32 : i32 to index
    %c0_38 = arith.constant 0 : index
    %c0_39 = arith.constant 0 : index
    %181 = vector.load %arg0[%180, %c0_38, %c0_39] : memref<8x2x384xf32, #tpu.memory_space<vmem>>, vector<1x2x384xf32>
    %182 = vector.shape_cast %181 : vector<1x2x384xf32> to vector<2x384xf32>
    %cst_40 = arith.constant dense<0.000000e+00> : vector<2x384xf32>
    %183 = tpu.matmul %179, %0, %cst_40 {dimension_numbers = #tpu.dot_dimension_numbers<[1], [0], [0], [1], [0, 0, 1, 1], [], []>} : vector<2x128xf32>, vector<128x384xf32>, vector<2x384xf32> -> vector<2x384xf32>
    %184 = vector.extract_strided_slice %182 {offsets = [0, 0], sizes = [2, 256], strides = [1, 1]} : vector<2x384xf32> to vector<2x256xf32>
    %185 = vector.extract_strided_slice %183 {offsets = [0, 0], sizes = [2, 256], strides = [1, 1]} : vector<2x384xf32> to vector<2x256xf32>
    %186 = arith.addf %184, %185 : vector<2x256xf32>
    %187 = arith.negf %186 : vector<2x256xf32>
    %188 = math.exp %187 : vector<2x256xf32>
    %cst_41 = arith.constant 1.000000e+00 : f32
    %189 = vector.broadcast %cst_41 : f32 to vector<2x256xf32>
    %190 = arith.addf %189, %188 : vector<2x256xf32>
    %191 = arith.divf %189, %190 : vector<2x256xf32>
    %192 = vector.extract_strided_slice %191 {offsets = [0, 0], sizes = [2, 128], strides = [1, 1]} : vector<2x256xf32> to vector<2x128xf32>
    %193 = vector.extract_strided_slice %191 {offsets = [0, 128], sizes = [2, 128], strides = [1, 1]} : vector<2x256xf32> to vector<2x128xf32>
    %194 = vector.extract_strided_slice %182 {offsets = [0, 256], sizes = [2, 128], strides = [1, 1]} : vector<2x384xf32> to vector<2x128xf32>
    %195 = vector.extract_strided_slice %183 {offsets = [0, 256], sizes = [2, 128], strides = [1, 1]} : vector<2x384xf32> to vector<2x128xf32>
    %196 = arith.addf %195, %3 : vector<2x128xf32>
    %197 = arith.mulf %192, %196 : vector<2x128xf32>
    %198 = arith.addf %194, %197 : vector<2x128xf32>
    %199 = math.tanh %198 : vector<2x128xf32>
    %cst_42 = arith.constant 1.000000e+00 : f32
    %200 = vector.broadcast %cst_42 : f32 to vector<2x128xf32>
    %201 = arith.subf %200, %193 : vector<2x128xf32>
    %202 = arith.mulf %201, %199 : vector<2x128xf32>
    %203 = arith.mulf %193, %179 : vector<2x128xf32>
    %204 = arith.addf %202, %203 : vector<2x128xf32>
    %c8_i32 = arith.constant 8 : i32
    %c0_43 = arith.constant 0 : index
    %c0_44 = arith.constant 0 : index
    %205 = vector.load %arg3[%c0_43, %c0_44] : memref<128x4xf32, #tpu.memory_space<vmem>>, vector<128x4xf32>
    %cst_45 = arith.constant dense<0.000000e+00> : vector<2x4xf32>
    %206 = tpu.matmul %204, %205, %cst_45 {dimension_numbers = #tpu.dot_dimension_numbers<[1], [0], [0], [1], [0, 0, 1, 1], [], []>} : vector<2x128xf32>, vector<128x4xf32>, vector<2x4xf32> -> vector<2x4xf32>
    %c0_46 = arith.constant 0 : index
    %c0_47 = arith.constant 0 : index
    %207 = vector.load %arg4[%c0_46, %c0_47] : memref<1x4xf32, #tpu.memory_space<vmem>>, vector<1x4xf32>
    %208 = vector.broadcast %207 : vector<1x4xf32> to vector<2x4xf32>
    %209 = arith.addf %206, %208 : vector<2x4xf32>
    %cst_48 = arith.constant dense<0xFF800000> : vector<2xf32>
    %210 = vector.multi_reduction <maximumf>, %209, %cst_48 [1] : vector<2x4xf32> to vector<2xf32>
    %211 = vector.shape_cast %210 : vector<2xf32> to vector<2x1xf32>
    %212 = vector.broadcast %211 : vector<2x1xf32> to vector<2x4xf32>
    %213 = arith.subf %209, %212 : vector<2x4xf32>
    %214 = math.exp %213 : vector<2x4xf32>
    %cst_49 = arith.constant dense<0.000000e+00> : vector<2xf32>
    %215 = vector.multi_reduction <add>, %214, %cst_49 [1] : vector<2x4xf32> to vector<2xf32>
    %216 = vector.shape_cast %215 : vector<2xf32> to vector<2x1xf32>
    %217 = tpu.reciprocal %216 : vector<2x1xf32> -> vector<2x1xf32>
    %218 = vector.broadcast %217 : vector<2x1xf32> to vector<2x4xf32>
    %219 = arith.mulf %214, %218 : vector<2x4xf32>
    %c0_50 = arith.constant 0 : index
    %c0_51 = arith.constant 0 : index
    %220 = vector.load %arg5[%c0_50, %c0_51] : memref<2x4xf32, #tpu.memory_space<vmem>>, vector<2x4xf32>
    tpu.vector_store %arg5[%c0_50, %c0_51], %219 {strides = array<i32>} : memref<2x4xf32, #tpu.memory_space<vmem>>, vector<2x4xf32>,
    %c0_52 = arith.constant 0 : index
    %c0_53 = arith.constant 0 : index
    %221 = vector.load %arg6[%c0_52, %c0_53] : memref<2x128xf32, #tpu.memory_space<vmem>>, vector<2x128xf32>
    tpu.vector_store %arg6[%c0_52, %c0_53], %204 {strides = array<i32>} : memref<2x128xf32, #tpu.memory_space<vmem>>, vector<2x128xf32>,
    return
  }
}

</mosaic_0001>

<llo_original>
// kernel: tpu_custom_call.1
$region0: #{tpu_custom_call.1}
  #allocation0 [shape = 'u32[]', space=smem, size = 0x4, offset = 0x4, fixed_abs, tag = 'smem constant byte address 0x4 - core index']
  #allocation1 [shape = 'u32[72,128]{1,0:T(1,128)}', space=vmem, size = 0x9000, scoped, tag = 'internal scratch']
  %s0 = inlined_call_operand.vmem [shape: f32[8,2,384], index: 0, kind: input, shape index: {}]
  %s1 = inlined_call_operand.hbm [shape: f32[128,384], index: 1, kind: input, shape index: {}]
  %s2 = inlined_call_operand.vmem [shape: f32[1,128], index: 2, kind: input, shape index: {}]
  %s3 = inlined_call_operand.vmem [shape: f32[128,4], index: 3, kind: input, shape index: {}]
  %s4 = inlined_call_operand.vmem [shape: f32[1,4], index: 4, kind: input, shape index: {}]
  %s5 = inlined_call_operand.hbm [shape: f32[2,4], index: 5, kind: output, shape index: {0}]
  %s6 = inlined_call_operand.hbm [shape: f32[2,128], index: 6, kind: output, shape index: {1}]
  %7 = xla_tuple %s5, %s6
  %s8 = sld [smem:[#allocation0]]
  $region42: #{tpu_custom_call.1} parent=0
    _
  %s10 = ssub.s32 1, %s8
  %s11 = scalar_select 0, %s10, %s8
  $region1: #{tpu_custom_call.1} parent=0
    #allocation2 [shape = 'u8[196608]{0}', space=vmem, size = 0x30000, scoped, tag = 'input window, operand 1, single buffered']
    #allocation3 [shape = 's32[1]{0}', space=sflag, size = 0x4, scoped, tag = 'scoped memory for tpu_custom_call.1']
    #allocation4 [shape = 's32[1]{0}', space=sflag, size = 0x4, scoped, tag = 'scoped memory for tpu_custom_call.1']
    #allocation5 [shape = 'u8[1024]{0}', space=vmem, size = 0x400, scoped, tag = 'output window, operand 0, single buffered']
    #allocation6 [shape = 'u8[1024]{0}', space=vmem, size = 0x400, scoped, tag = 'output window, operand 1, single buffered']
    #allocation7 [shape = 's32[1]{0}', space=sflag, size = 0x4, scoped, tag = 'scoped memory for tpu_custom_call.1']
    %12 = vsyncpa [#allocation3], 0
    %13 = vsyncpa [#allocation4], 0
    %14 = vsyncpa [#allocation7], 0
    // Predicated region
    $region2: #{tpu_custom_call.1} parent=1 // pred_check
      _
    $region3: #{tpu_custom_call.1} parent=1 // pred_check_branch
      %16 = sbr.rel (0) target = $region5
    $region4: #{tpu_custom_call.1} parent=1 // pred_region
      _
    $region5: #{tpu_custom_call.1} parent=1 // pred_fallthru
      _
    // Predicated region
    $region6: #{tpu_custom_call.1} parent=1 // pred_check
      _
    $region7: #{tpu_custom_call.1} parent=1 // pred_check_branch
      %18 = sbr.rel (0) target = $region9
    $region8: #{tpu_custom_call.1} parent=1 // pred_region
      %20 = vsyncadd [#allocation3], 0
      %s21 = sshll.u32 %s1, 4
      %s22 = int_to_ptr.hbm [resolvable:$true] %s21
      %s23 = sshll.u32 [#allocation2], 4
      %s24 = int_to_ptr.vmem [resolvable:$true] %s23
      %29 = dma.hbm_to_vmem [thread:$0]  %s22, 6144, %s24, [#allocation3], 384, 384, 24
    $region9: #{tpu_custom_call.1} parent=1 // pred_fallthru
      _
    // Predicated region
    $region10: #{tpu_custom_call.1} parent=1 // pred_check
      _
    $region11: #{tpu_custom_call.1} parent=1 // pred_check_branch
      %31 = sbr.rel (0) target = $region13
    $region12: #{tpu_custom_call.1} parent=1 // pred_region
      _
    $region13: #{tpu_custom_call.1} parent=1 // pred_fallthru
      _
    // Predicated region
    $region14: #{tpu_custom_call.1} parent=1 // pred_check
      _
    $region15: #{tpu_custom_call.1} parent=1 // pred_check_branch
      %33 = sbr.rel (0) target = $region17
    $region16: #{tpu_custom_call.1} parent=1 // pred_region
      _
    $region17: #{tpu_custom_call.1} parent=1 // pred_fallthru
      _
    // Predicated region
    $region18: #{tpu_custom_call.1} parent=1 // pred_check
      _
    $region19: #{tpu_custom_call.1} parent=1 // pred_check_branch
      %35 = sbr.rel (0) target = $region21
    $region20: #{tpu_custom_call.1} parent=1 // pred_region
      _
    $region21: #{tpu_custom_call.1} parent=1 // pred_fallthru
      _
    // Predicated region
    $region22: #{tpu_custom_call.1} parent=1 // pred_check
      _
    $region23: #{tpu_custom_call.1} parent=1 // pred_check_branch
      %37 = sbr.rel (0) target = $region25
    $region24: #{tpu_custom_call.1} parent=1 // pred_region
      %39 = dma.done [#allocation3], 6144
    $region25: #{tpu_custom_call.1} parent=1 // pred_fallthru
      _
    %v40 = vld [vmem:[#allocation2] sm:$0xff]
    %v41 = vld [vmem:[#allocation2 + $0x8] sm:$0xff]
    %v42 = vld [vmem:[#allocation2 + $0x10] sm:$0xff]
    %v43 = vld [vmem:[#allocation2 + $0x18] sm:$0xff]
    %v44 = vld [vmem:[#allocation2 + $0x20] sm:$0xff]
    %v45 = vld [vmem:[#allocation2 + $0x28] sm:$0xff]
    %v46 = vld [vmem:[#allocation2 + $0x30] sm:$0xff]
    %v47 = vld [vmem:[#allocation2 + $0x38] sm:$0xff]
    %v48 = vld [vmem:[#allocation2 + $0x40] sm:$0xff]
    %v49 = vld [vmem:[#allocation2 + $0x48] sm:$0xff]
    %v50 = vld [vmem:[#allocation2 + $0x50] sm:$0xff]
    %v51 = vld [vmem:[#allocation2 + $0x58] sm:$0xff]
    %v52 = vld [vmem:[#allocation2 + $0x60] sm:$0xff]
    %v53 = vld [vmem:[#allocation2 + $0x68] sm:$0xff]
    %v54 = vld [vmem:[#allocation2 + $0x70] sm:$0xff]
    %v55 = vld [vmem:[#allocation2 + $0x78] sm:$0xff]
    %v56 = vld [vmem:[#allocation2 + $0x80] sm:$0xff]
    %v57 = vld [vmem:[#allocation2 + $0x88] sm:$0xff]
    %v58 = vld [vmem:[#allocation2 + $0x90] sm:$0xff]
    %v59 = vld [vmem:[#allocation2 + $0x98] sm:$0xff]
    %v60 = vld [vmem:[#allocation2 + $0xa0] sm:$0xff]
    %v61 = vld [vmem:[#allocation2 + $0xa8] sm:$0xff]
    %v62 = vld [vmem:[#allocation2 + $0xb0] sm:$0xff]
    %v63 = vld [vmem:[#allocation2 + $0xb8] sm:$0xff]
    %v64 = vld [vmem:[#allocation2 + $0xc0] sm:$0xff]
    %v65 = vld [vmem:[#allocation2 + $0xc8] sm:$0xff]
    %v66 = vld [vmem:[#allocation2 + $0xd0] sm:$0xff]
    %v67 = vld [vmem:[#allocation2 + $0xd8] sm:$0xff]
    %v68 = vld [vmem:[#allocation2 + $0xe0] sm:$0xff]
    %v69 = vld [vmem:[#allocation2 + $0xe8] sm:$0xff]
    %v70 = vld [vmem:[#allocation2 + $0xf0] sm:$0xff]
    %v71 = vld [vmem:[#allocation2 + $0xf8] sm:$0xff]
    %v72 = vld [vmem:[#allocation2 + $0x100] sm:$0xff]
    %v73 = vld [vmem:[#allocation2 + $0x108] sm:$0xff]
    %v74 = vld [vmem:[#allocation2 + $0x110] sm:$0xff]
    %v75 = vld [vmem:[#allocation2 + $0x118] sm:$0xff]
    %v76 = vld [vmem:[#allocation2 + $0x120] sm:$0xff]
    %v77 = vld [vmem:[#allocation2 + $0x128] sm:$0xff]
    %v78 = vld [vmem:[#allocation2 + $0x130] sm:$0xff]
    %v79 = vld [vmem:[#allocation2 + $0x138] sm:$0xff]
    %v80 = vld [vmem:[#allocation2 + $0x140] sm:$0xff]
    %v81 = vld [vmem:[#allocation2 + $0x148] sm:$0xff]
    %v82 = vld [vmem:[#allocation2 + $0x150] sm:$0xff]
    %v83 = vld [vmem:[#allocation2 + $0x158] sm:$0xff]
    %v84 = vld [vmem:[#allocation2 + $0x160] sm:$0xff]
    %v85 = vld [vmem:[#allocation2 + $0x168] sm:$0xff]
    %v86 = vld [vmem:[#allocation2 + $0x170] sm:$0xff]
    %v87 = vld [vmem:[#allocation2 + $0x178] sm:$0xff]
    %v88 = vld [vmem:[%s2] sm:$0x1]
    %v90 = vperm.slane %v88, 0
    %v92 = vld [vmem:[%s0] sm:$0x3f]
    %93 = vmatpush.msra.mxu0 %v85
    %94 = vmatpush.msra.mxu0 %v82
    %95 = vmatpush.msra.mxu0 %v79
    %96 = vmatpush.msra.mxu0 %v76
    %97 = vmatpush.msra.mxu0 %v73
    %98 = vmatpush.msra.mxu0 %v70
    %99 = vmatpush.msra.mxu0 %v67
    %100 = vmatpush.msra.mxu0 %v64
    %101 = vmatpush.msra.mxu0 %v61
    %102 = vmatpush.msra.mxu0 %v58
    %103 = vmatpush.msra.mxu0 %v55
    %104 = vmatpush.msra.mxu0 %v52
    %105 = vmatpush.msra.mxu0 %v49
    %106 = vmatpush.msra.mxu0 %v46
    %107 = vmatpush.msra.mxu0 %v43
    %108 = vmatpush.msra.mxu0 %v40
    %109 = vmatmul.f32.gmra.mxu0 0.0
    %v110 = vpop.f32.mrf.mxu0
    %v111 = vadd.f32 0.0, %v110
    %112 = vdwg.mxu0
    %113 = vmatpush.msra.mxu0 %v86
    %114 = vmatpush.msra.mxu0 %v83
    %115 = vmatpush.msra.mxu0 %v80
    %116 = vmatpush.msra.mxu0 %v77
    %117 = vmatpush.msra.mxu0 %v74
    %118 = vmatpush.msra.mxu0 %v71
    %119 = vmatpush.msra.mxu0 %v68
    %120 = vmatpush.msra.mxu0 %v65
    %121 = vmatpush.msra.mxu0 %v62
    %122 = vmatpush.msra.mxu0 %v59
    %123 = vmatpush.msra.mxu0 %v56
    %124 = vmatpush.msra.mxu0 %v53
    %125 = vmatpush.msra.mxu0 %v50
    %126 = vmatpush.msra.mxu0 %v47
    %127 = vmatpush.msra.mxu0 %v44
    %128 = vmatpush.msra.mxu0 %v41
    %129 = vmatmul.f32.gmra.mxu0 0.0
    %v130 = vpop.f32.mrf.mxu0
    %v131 = vadd.f32 0.0, %v130
    %132 = vdwg.mxu0
    %133 = vmatpush.msra.mxu0 %v87
    %134 = vmatpush.msra.mxu0 %v84
    %135 = vmatpush.msra.mxu0 %v81
    %136 = vmatpush.msra.mxu0 %v78
    %137 = vmatpush.msra.mxu0 %v75
    %138 = vmatpush.msra.mxu0 %v72
    %139 = vmatpush.msra.mxu0 %v69
    %140 = vmatpush.msra.mxu0 %v66
    %141 = vmatpush.msra.mxu0 %v63
    %142 = vmatpush.msra.mxu0 %v60
    %143 = vmatpush.msra.mxu0 %v57
    %144 = vmatpush.msra.mxu0 %v54
    %145 = vmatpush.msra.mxu0 %v51
    %146 = vmatpush.msra.mxu0 %v48
    %147 = vmatpush.msra.mxu0 %v45
    %148 = vmatpush.msra.mxu0 %v42
    %149 = vmatmul.f32.gmra.mxu0 0.0
    %v150 = vpop.f32.mrf.mxu0
    %v151 = vadd.f32 0.0, %v150
    %152 = vdwg.mxu0
    %v155 = vrot.slane %v131, 6
    %vm156 = vcmask 1041408
    %v157 = vsel %vm156, %v111, %v155
    %v159 = vadd.f32 %v92, %v157
    %v160 = vxor.u32 %v159, 2147483648
    %v161 = vmul.f32 %v160, 1.442695
    %v162 = vpow.pop %v161
    %v163 = vadd.f32 %v162, 1.0
    %v164 = vrcp.pop %v163
    %v165 = vmul.f32 %v163, %v164
    %v166 = vsub.f32 1.0, %v165
    %v167 = vmul.f32 %v164, %v166
    %v168 = vadd.f32 %v164, %v167
    %vm169 = vweird.f32 %v163
    %vm170 = vweird.f32 %v164
    %vm171 = vmor %vm169, %vm170
    %v172 = vsel %vm171, %v164, %v168
    %v173 = vand.u32 2147483647, %v163
    %vm174 = vcmp.eq.f32.partialorder %v173, 8.507059e+37
    %v175 = vand.u32 %v163, 2147483648
    %v176 = vor.u32 1.1754944e-38, %v175
    %v177 = vsel %vm174, %v176, %v172
    %v178 = vmul.f32 1.0, %v177
    %v179 = vadd.f32 %v151, %v90
    %v180 = vmul.f32 %v178, %v179
    %v182 = vrot.slane %v92, 4
    %v184 = vadd.f32 %v182, %v180
    %v185 = vtanh.pop %v184
    %v187 = vrot.slane %v178, 2
    %v189 = vsub.f32 1.0, %v187
    %v190 = vmul.f32 %v189, %v185
    %v191 = vmul.f32 %v187, 0.0
    %v192 = vadd.f32 %v190, %v191
    %s193 = scalar_lea.vmem %s0, 6
    %v194 = vld [vmem:[%s193] sm:$0x3f]
    %195 = vmatpush.msra.mxu0 %v85
    %196 = vmatpush.msra.mxu0 %v82
    %197 = vmatpush.msra.mxu0 %v79
    %198 = vmatpush.msra.mxu0 %v76
    %199 = vmatpush.msra.mxu0 %v73
    %200 = vmatpush.msra.mxu0 %v70
    %201 = vmatpush.msra.mxu0 %v67
    %202 = vmatpush.msra.mxu0 %v64
    %203 = vmatpush.msra.mxu0 %v61
    %204 = vmatpush.msra.mxu0 %v58
    %205 = vmatpush.msra.mxu0 %v55
    %206 = vmatpush.msra.mxu0 %v52
    %207 = vmatpush.msra.mxu0 %v49
    %208 = vmatpush.msra.mxu0 %v46
    %209 = vmatpush.msra.mxu0 %v43
    %210 = vmatpush.msra.mxu0 %v40
    %211 = vmatmul.f32.gmra.mxu0 %v192
    %v212 = vpop.f32.mrf.mxu0
    %v213 = vadd.f32 0.0, %v212
    %214 = vdwg.mxu0
    %215 = vmatpush.msra.mxu0 %v86
    %216 = vmatpush.msra.mxu0 %v83
    %217 = vmatpush.msra.mxu0 %v80
    %218 = vmatpush.msra.mxu0 %v77
    %219 = vmatpush.msra.mxu0 %v74
    %220 = vmatpush.msra.mxu0 %v71
    %221 = vmatpush.msra.mxu0 %v68
    %222 = vmatpush.msra.mxu0 %v65
    %223 = vmatpush.msra.mxu0 %v62
    %224 = vmatpush.msra.mxu0 %v59
    %225 = vmatpush.msra.mxu0 %v56
    %226 = vmatpush.msra.mxu0 %v53
    %227 = vmatpush.msra.mxu0 %v50
    %228 = vmatpush.msra.mxu0 %v47
    %229 = vmatpush.msra.mxu0 %v44
    %230 = vmatpush.msra.mxu0 %v41
    %231 = vmatmul.f32.gmra.mxu0 %v192
    %v232 = vpop.f32.mrf.mxu0
    %v233 = vadd.f32 0.0, %v232
    %234 = vdwg.mxu0
    %235 = vmatpush.msra.mxu0 %v87
    %236 = vmatpush.msra.mxu0 %v84
    %237 = vmatpush.msra.mxu0 %v81
    %238 = vmatpush.msra.mxu0 %v78
    %239 = vmatpush.msra.mxu0 %v75
    %240 = vmatpush.msra.mxu0 %v72
    %241 = vmatpush.msra.mxu0 %v69
    %242 = vmatpush.msra.mxu0 %v66
    %243 = vmatpush.msra.mxu0 %v63
    %244 = vmatpush.msra.mxu0 %v60
    %245 = vmatpush.msra.mxu0 %v57
    %246 = vmatpush.msra.mxu0 %v54
    %247 = vmatpush.msra.mxu0 %v51
    %248 = vmatpush.msra.mxu0 %v48
    %249 = vmatpush.msra.mxu0 %v45
    %250 = vmatpush.msra.mxu0 %v42
    %251 = vmatmul.f32.gmra.mxu0 %v192
    %v252 = vpop.f32.mrf.mxu0
    %v253 = vadd.f32 0.0, %v252
    %254 = vdwg.mxu0
    %v257 = vrot.slane %v233, 6
    %v258 = vsel %vm156, %v213, %v257
    %v260 = vadd.f32 %v194, %v258
    %v261 = vxor.u32 %v260, 2147483648
    %v262 = vmul.f32 %v261, 1.442695
    %v263 = vpow.pop %v262
    %v264 = vadd.f32 %v263, 1.0
    %v265 = vrcp.pop %v264
    %v266 = vmul.f32 %v264, %v265
    %v267 = vsub.f32 1.0, %v266
    %v268 = vmul.f32 %v265, %v267
    %v269 = vadd.f32 %v265, %v268
    %vm270 = vweird.f32 %v264
    %vm271 = vweird.f32 %v265
    %vm272 = vmor %vm270, %vm271
    %v273 = vsel %vm272, %v265, %v269
    %v274 = vand.u32 2147483647, %v264
    %vm275 = vcmp.eq.f32.partialorder %v274, 8.507059e+37
    %v276 = vand.u32 %v264, 2147483648
    %v277 = vor.u32 1.1754944e-38, %v276
    %v278 = vsel %vm275, %v277, %v273
    %v279 = vmul.f32 1.0, %v278
    %v280 = vadd.f32 %v253, %v90
    %v281 = vmul.f32 %v279, %v280
    %v283 = vrot.slane %v194, 4
    %v285 = vadd.f32 %v283, %v281
    %v286 = vtanh.pop %v285
    %v288 = vrot.slane %v279, 2
    %v290 = vsub.f32 1.0, %v288
    %v291 = vmul.f32 %v290, %v286
    %v292 = vmul.f32 %v288, %v192
    %v293 = vadd.f32 %v291, %v292
    %s294 = scalar_lea.vmem %s0, 12
    %v295 = vld [vmem:[%s294] sm:$0x3f]
    %296 = vmatpush.msra.mxu0 %v85
    %297 = vmatpush.msra.mxu0 %v82
    %298 = vmatpush.msra.mxu0 %v79
    %299 = vmatpush.msra.mxu0 %v76
    %300 = vmatpush.msra.mxu0 %v73
    %301 = vmatpush.msra.mxu0 %v70
    %302 = vmatpush.msra.mxu0 %v67
    %303 = vmatpush.msra.mxu0 %v64
    %304 = vmatpush.msra.mxu0 %v61
    %305 = vmatpush.msra.mxu0 %v58
    %306 = vmatpush.msra.mxu0 %v55
    %307 = vmatpush.msra.mxu0 %v52
    %308 = vmatpush.msra.mxu0 %v49
    %309 = vmatpush.msra.mxu0 %v46
    %310 = vmatpush.msra.mxu0 %v43
    %311 = vmatpush.msra.mxu0 %v40
    %312 = vmatmul.f32.gmra.mxu0 %v293
    %v313 = vpop.f32.mrf.mxu0
    %v314 = vadd.f32 0.0, %v313
    %315 = vdwg.mxu0
    %316 = vmatpush.msra.mxu0 %v86
    %317 = vmatpush.msra.mxu0 %v83
    %318 = vmatpush.msra.mxu0 %v80
    %319 = vmatpush.msra.mxu0 %v77
    %320 = vmatpush.msra.mxu0 %v74
    %321 = vmatpush.msra.mxu0 %v71
    %322 = vmatpush.msra.mxu0 %v68
    %323 = vmatpush.msra.mxu0 %v65
    %324 = vmatpush.msra.mxu0 %v62
    %325 = vmatpush.msra.mxu0 %v59
    %326 = vmatpush.msra.mxu0 %v56
    %327 = vmatpush.msra.mxu0 %v53
    %328 = vmatpush.msra.mxu0 %v50
    %329 = vmatpush.msra.mxu0 %v47
    %330 = vmatpush.msra.mxu0 %v44
    %331 = vmatpush.msra.mxu0 %v41
    %332 = vmatmul.f32.gmra.mxu0 %v293
    %v333 = vpop.f32.mrf.mxu0
    %v334 = vadd.f32 0.0, %v333
    %335 = vdwg.mxu0
    %336 = vmatpush.msra.mxu0 %v87
    %337 = vmatpush.msra.mxu0 %v84
    %338 = vmatpush.msra.mxu0 %v81
    %339 = vmatpush.msra.mxu0 %v78
    %340 = vmatpush.msra.mxu0 %v75
    %341 = vmatpush.msra.mxu0 %v72
    %342 = vmatpush.msra.mxu0 %v69
    %343 = vmatpush.msra.mxu0 %v66
    %344 = vmatpush.msra.mxu0 %v63
    %345 = vmatpush.msra.mxu0 %v60
    %346 = vmatpush.msra.mxu0 %v57
    %347 = vmatpush.msra.mxu0 %v54
    %348 = vmatpush.msra.mxu0 %v51
    %349 = vmatpush.msra.mxu0 %v48
    %350 = vmatpush.msra.mxu0 %v45
    %351 = vmatpush.msra.mxu0 %v42
    %352 = vmatmul.f32.gmra.mxu0 %v293
    %v353 = vpop.f32.mrf.mxu0
    %v354 = vadd.f32 0.0, %v353
    %355 = vdwg.mxu0
    %v358 = vrot.slane %v334, 6
    %v359 = vsel %vm156, %v314, %v358
    %v361 = vadd.f32 %v295, %v359
    %v362 = vxor.u32 %v361, 2147483648
    %v363 = vmul.f32 %v362, 1.442695
    %v364 = vpow.pop %v363
    %v365 = vadd.f32 %v364, 1.0
    %v366 = vrcp.pop %v365
    %v367 = vmul.f32 %v365, %v366
    %v368 = vsub.f32 1.0, %v367
    %v369 = vmul.f32 %v366, %v368
    %v370 = vadd.f32 %v366, %v369
    %vm371 = vweird.f32 %v365
    %vm372 = vweird.f32 %v366
    %vm373 = vmor %vm371, %vm372
    %v374 = vsel %vm373, %v366, %v370
    %v375 = vand.u32 2147483647, %v365
    %vm376 = vcmp.eq.f32.partialorder %v375, 8.507059e+37
    %v377 = vand.u32 %v365, 2147483648
    %v378 = vor.u32 1.1754944e-38, %v377
    %v379 = vsel %vm376, %v378, %v374
    %v380 = vmul.f32 1.0, %v379
    %v381 = vadd.f32 %v354, %v90
    %v382 = vmul.f32 %v380, %v381
    %v384 = vrot.slane %v295, 4
    %v386 = vadd.f32 %v384, %v382
    %v387 = vtanh.pop %v386
    %v389 = vrot.slane %v380, 2
    %v391 = vsub.f32 1.0, %v389
    %v392 = vmul.f32 %v391, %v387
    %v393 = vmul.f32 %v389, %v293
    %v394 = vadd.f32 %v392, %v393
    %s395 = scalar_lea.vmem %s0, 18
    %v396 = vld [vmem:[%s395] sm:$0x3f]
    %397 = vmatpush.msra.mxu0 %v85
    %398 = vmatpush.msra.mxu0 %v82
    %399 = vmatpush.msra.mxu0 %v79
    %400 = vmatpush.msra.mxu0 %v76
    %401 = vmatpush.msra.mxu0 %v73
    %402 = vmatpush.msra.mxu0 %v70
    %403 = vmatpush.msra.mxu0 %v67
    %404 = vmatpush.msra.mxu0 %v64
    %405 = vmatpush.msra.mxu0 %v61
    %406 = vmatpush.msra.mxu0 %v58
    %407 = vmatpush.msra.mxu0 %v55
    %408 = vmatpush.msra.mxu0 %v52
    %409 = vmatpush.msra.mxu0 %v49
    %410 = vmatpush.msra.mxu0 %v46
    %411 = vmatpush.msra.mxu0 %v43
    %412 = vmatpush.msra.mxu0 %v40
    %413 = vmatmul.f32.gmra.mxu0 %v394
    %v414 = vpop.f32.mrf.mxu0
    %v415 = vadd.f32 0.0, %v414
    %416 = vdwg.mxu0
    %417 = vmatpush.msra.mxu0 %v86
    %418 = vmatpush.msra.mxu0 %v83
    %419 = vmatpush.msra.mxu0 %v80
    %420 = vmatpush.msra.mxu0 %v77
    %421 = vmatpush.msra.mxu0 %v74
    %422 = vmatpush.msra.mxu0 %v71
    %423 = vmatpush.msra.mxu0 %v68
    %424 = vmatpush.msra.mxu0 %v65
    %425 = vmatpush.msra.mxu0 %v62
    %426 = vmatpush.msra.mxu0 %v59
    %427 = vmatpush.msra.mxu0 %v56
    %428 = vmatpush.msra.mxu0 %v53
    %429 = vmatpush.msra.mxu0 %v50
    %430 = vmatpush.msra.mxu0 %v47
    %431 = vmatpush.msra.mxu0 %v44
    %432 = vmatpush.msra.mxu0 %v41
    %433 = vmatmul.f32.gmra.mxu0 %v394
    %v434 = vpop.f32.mrf.mxu0
    %v435 = vadd.f32 0.0, %v434
    %436 = vdwg.mxu0
    %437 = vmatpush.msra.mxu0 %v87
    %438 = vmatpush.msra.mxu0 %v84
    %439 = vmatpush.msra.mxu0 %v81
    %440 = vmatpush.msra.mxu0 %v78
    %441 = vmatpush.msra.mxu0 %v75
    %442 = vmatpush.msra.mxu0 %v72
    %443 = vmatpush.msra.mxu0 %v69
    %444 = vmatpush.msra.mxu0 %v66
    %445 = vmatpush.msra.mxu0 %v63
    %446 = vmatpush.msra.mxu0 %v60
    %447 = vmatpush.msra.mxu0 %v57
    %448 = vmatpush.msra.mxu0 %v54
    %449 = vmatpush.msra.mxu0 %v51
    %450 = vmatpush.msra.mxu0 %v48
    %451 = vmatpush.msra.mxu0 %v45
    %452 = vmatpush.msra.mxu0 %v42
    %453 = vmatmul.f32.gmra.mxu0 %v394
    %v454 = vpop.f32.mrf.mxu0
    %v455 = vadd.f32 0.0, %v454
    %456 = vdwg.mxu0
    %v459 = vrot.slane %v435, 6
    %v460 = vsel %vm156, %v415, %v459
    %v462 = vadd.f32 %v396, %v460
    %v463 = vxor.u32 %v462, 2147483648
    %v464 = vmul.f32 %v463, 1.442695
    %v465 = vpow.pop %v464
    %v466 = vadd.f32 %v465, 1.0
    %v467 = vrcp.pop %v466
    %v468 = vmul.f32 %v466, %v467
    %v469 = vsub.f32 1.0, %v468
    %v470 = vmul.f32 %v467, %v469
    %v471 = vadd.f32 %v467, %v470
    %vm472 = vweird.f32 %v466
    %vm473 = vweird.f32 %v467
    %vm474 = vmor %vm472, %vm473
    %v475 = vsel %vm474, %v467, %v471
    %v476 = vand.u32 2147483647, %v466
    %vm477 = vcmp.eq.f32.partialorder %v476, 8.507059e+37
    %v478 = vand.u32 %v466, 2147483648
    %v479 = vor.u32 1.1754944e-38, %v478
    %v480 = vsel %vm477, %v479, %v475
    %v481 = vmul.f32 1.0, %v480
    %v482 = vadd.f32 %v455, %v90
    %v483 = vmul.f32 %v481, %v482
    %v485 = vrot.slane %v396, 4
    %v487 = vadd.f32 %v485, %v483
    %v488 = vtanh.pop %v487
    %v490 = vrot.slane %v481, 2
    %v492 = vsub.f32 1.0, %v490
    %v493 = vmul.f32 %v492, %v488
    %v494 = vmul.f32 %v490, %v394
    %v495 = vadd.f32 %v493, %v494
    %s496 = scalar_lea.vmem %s0, 24
    %v497 = vld [vmem:[%s496] sm:$0x3f]
    %498 = vmatpush.msra.mxu0 %v85
    %499 = vmatpush.msra.mxu0 %v82
    %500 = vmatpush.msra.mxu0 %v79
    %501 = vmatpush.msra.mxu0 %v76
    %502 = vmatpush.msra.mxu0 %v73
    %503 = vmatpush.msra.mxu0 %v70
    %504 = vmatpush.msra.mxu0 %v67
    %505 = vmatpush.msra.mxu0 %v64
    %506 = vmatpush.msra.mxu0 %v61
    %507 = vmatpush.msra.mxu0 %v58
    %508 = vmatpush.msra.mxu0 %v55
    %509 = vmatpush.msra.mxu0 %v52
    %510 = vmatpush.msra.mxu0 %v49
    %511 = vmatpush.msra.mxu0 %v46
    %512 = vmatpush.msra.mxu0 %v43
    %513 = vmatpush.msra.mxu0 %v40
    %514 = vmatmul.f32.gmra.mxu0 %v495
    %v515 = vpop.f32.mrf.mxu0
    %v516 = vadd.f32 0.0, %v515
    %517 = vdwg.mxu0
    %518 = vmatpush.msra.mxu0 %v86
    %519 = vmatpush.msra.mxu0 %v83
    %520 = vmatpush.msra.mxu0 %v80
    %521 = vmatpush.msra.mxu0 %v77
    %522 = vmatpush.msra.mxu0 %v74
    %523 = vmatpush.msra.mxu0 %v71
    %524 = vmatpush.msra.mxu0 %v68
    %525 = vmatpush.msra.mxu0 %v65
    %526 = vmatpush.msra.mxu0 %v62
    %527 = vmatpush.msra.mxu0 %v59
    %528 = vmatpush.msra.mxu0 %v56
    %529 = vmatpush.msra.mxu0 %v53
    %530 = vmatpush.msra.mxu0 %v50
    %531 = vmatpush.msra.mxu0 %v47
    %532 = vmatpush.msra.mxu0 %v44
    %533 = vmatpush.msra.mxu0 %v41
    %534 = vmatmul.f32.gmra.mxu0 %v495
    %v535 = vpop.f32.mrf.mxu0
    %v536 = vadd.f32 0.0, %v535
    %537 = vdwg.mxu0
    %538 = vmatpush.msra.mxu0 %v87
    %539 = vmatpush.msra.mxu0 %v84
    %540 = vmatpush.msra.mxu0 %v81
    %541 = vmatpush.msra.mxu0 %v78
    %542 = vmatpush.msra.mxu0 %v75
    %543 = vmatpush.msra.mxu0 %v72
    %544 = vmatpush.msra.mxu0 %v69
    %545 = vmatpush.msra.mxu0 %v66
    %546 = vmatpush.msra.mxu0 %v63
    %547 = vmatpush.msra.mxu0 %v60
    %548 = vmatpush.msra.mxu0 %v57
    %549 = vmatpush.msra.mxu0 %v54
    %550 = vmatpush.msra.mxu0 %v51
    %551 = vmatpush.msra.mxu0 %v48
    %552 = vmatpush.msra.mxu0 %v45
    %553 = vmatpush.msra.mxu0 %v42
    %554 = vmatmul.f32.gmra.mxu0 %v495
    %v555 = vpop.f32.mrf.mxu0
    %v556 = vadd.f32 0.0, %v555
    %557 = vdwg.mxu0
    %v560 = vrot.slane %v536, 6
    %v561 = vsel %vm156, %v516, %v560
    %v563 = vadd.f32 %v497, %v561
    %v564 = vxor.u32 %v563, 2147483648
    %v565 = vmul.f32 %v564, 1.442695
    %v566 = vpow.pop %v565
    %v567 = vadd.f32 %v566, 1.0
    %v568 = vrcp.pop %v567
    %v569 = vmul.f32 %v567, %v568
    %v570 = vsub.f32 1.0, %v569
    %v571 = vmul.f32 %v568, %v570
    %v572 = vadd.f32 %v568, %v571
    %vm573 = vweird.f32 %v567
    %vm574 = vweird.f32 %v568
    %vm575 = vmor %vm573, %vm574
    %v576 = vsel %vm575, %v568, %v572
    %v577 = vand.u32 2147483647, %v567
    %vm578 = vcmp.eq.f32.partialorder %v577, 8.507059e+37
    %v579 = vand.u32 %v567, 2147483648
    %v580 = vor.u32 1.1754944e-38, %v579
    %v581 = vsel %vm578, %v580, %v576
    %v582 = vmul.f32 1.0, %v581
    %v583 = vadd.f32 %v556, %v90
    %v584 = vmul.f32 %v582, %v583
    %v586 = vrot.slane %v497, 4
    %v588 = vadd.f32 %v586, %v584
    %v589 = vtanh.pop %v588
    %v591 = vrot.slane %v582, 2
    %v593 = vsub.f32 1.0, %v591
    %v594 = vmul.f32 %v593, %v589
    %v595 = vmul.f32 %v591, %v495
    %v596 = vadd.f32 %v594, %v595
    %s597 = scalar_lea.vmem %s0, 30
    %v598 = vld [vmem:[%s597] sm:$0x3f]
    %599 = vmatpush.msra.mxu0 %v85
    %600 = vmatpush.msra.mxu0 %v82
    %601 = vmatpush.msra.mxu0 %v79
    %602 = vmatpush.msra.mxu0 %v76
    %603 = vmatpush.msra.mxu0 %v73
    %604 = vmatpush.msra.mxu0 %v70
    %605 = vmatpush.msra.mxu0 %v67
    %606 = vmatpush.msra.mxu0 %v64
    %607 = vmatpush.msra.mxu0 %v61
    %608 = vmatpush.msra.mxu0 %v58
    %609 = vmatpush.msra.mxu0 %v55
    %610 = vmatpush.msra.mxu0 %v52
    %611 = vmatpush.msra.mxu0 %v49
    %612 = vmatpush.msra.mxu0 %v46
    %613 = vmatpush.msra.mxu0 %v43
    %614 = vmatpush.msra.mxu0 %v40
    %615 = vmatmul.f32.gmra.mxu0 %v596
    %v616 = vpop.f32.mrf.mxu0
    %v617 = vadd.f32 0.0, %v616
    %618 = vdwg.mxu0
    %619 = vmatpush.msra.mxu0 %v86
    %620 = vmatpush.msra.mxu0 %v83
    %621 = vmatpush.msra.mxu0 %v80
    %622 = vmatpush.msra.mxu0 %v77
    %623 = vmatpush.msra.mxu0 %v74
    %624 = vmatpush.msra.mxu0 %v71
    %625 = vmatpush.msra.mxu0 %v68
    %626 = vmatpush.msra.mxu0 %v65
    %627 = vmatpush.msra.mxu0 %v62
    %628 = vmatpush.msra.mxu0 %v59
    %629 = vmatpush.msra.mxu0 %v56
    %630 = vmatpush.msra.mxu0 %v53
    %631 = vmatpush.msra.mxu0 %v50
    %632 = vmatpush.msra.mxu0 %v47
    %633 = vmatpush.msra.mxu0 %v44
    %634 = vmatpush.msra.mxu0 %v41
    %635 = vmatmul.f32.gmra.mxu0 %v596
    %v636 = vpop.f32.mrf.mxu0
    %v637 = vadd.f32 0.0, %v636
    %638 = vdwg.mxu0
    %639 = vmatpush.msra.mxu0 %v87
    %640 = vmatpush.msra.mxu0 %v84
    %641 = vmatpush.msra.mxu0 %v81
    %642 = vmatpush.msra.mxu0 %v78
    %643 = vmatpush.msra.mxu0 %v75
    %644 = vmatpush.msra.mxu0 %v72
    %645 = vmatpush.msra.mxu0 %v69
    %646 = vmatpush.msra.mxu0 %v66
    %647 = vmatpush.msra.mxu0 %v63
    %648 = vmatpush.msra.mxu0 %v60
    %649 = vmatpush.msra.mxu0 %v57
    %650 = vmatpush.msra.mxu0 %v54
    %651 = vmatpush.msra.mxu0 %v51
    %652 = vmatpush.msra.mxu0 %v48
    %653 = vmatpush.msra.mxu0 %v45
    %654 = vmatpush.msra.mxu0 %v42
    %655 = vmatmul.f32.gmra.mxu0 %v596
    %v656 = vpop.f32.mrf.mxu0
    %v657 = vadd.f32 0.0, %v656
    %658 = vdwg.mxu0
    %v661 = vrot.slane %v637, 6
    %v662 = vsel %vm156, %v617, %v661
    %v664 = vadd.f32 %v598, %v662
    %v665 = vxor.u32 %v664, 2147483648
    %v666 = vmul.f32 %v665, 1.442695
    %v667 = vpow.pop %v666
    %v668 = vadd.f32 %v667, 1.0
    %v669 = vrcp.pop %v668
    %v670 = vmul.f32 %v668, %v669
    %v671 = vsub.f32 1.0, %v670
    %v672 = vmul.f32 %v669, %v671
    %v673 = vadd.f32 %v669, %v672
    %vm674 = vweird.f32 %v668
    %vm675 = vweird.f32 %v669
    %vm676 = vmor %vm674, %vm675
    %v677 = vsel %vm676, %v669, %v673
    %v678 = vand.u32 2147483647, %v668
    %vm679 = vcmp.eq.f32.partialorder %v678, 8.507059e+37
    %v680 = vand.u32 %v668, 2147483648
    %v681 = vor.u32 1.1754944e-38, %v680
    %v682 = vsel %vm679, %v681, %v677
    %v683 = vmul.f32 1.0, %v682
    %v684 = vadd.f32 %v657, %v90
    %v685 = vmul.f32 %v683, %v684
    %v687 = vrot.slane %v598, 4
    %v689 = vadd.f32 %v687, %v685
    %v690 = vtanh.pop %v689
    %v692 = vrot.slane %v683, 2
    %v694 = vsub.f32 1.0, %v692
    %v695 = vmul.f32 %v694, %v690
    %v696 = vmul.f32 %v692, %v596
    %v697 = vadd.f32 %v695, %v696
    %s698 = scalar_lea.vmem %s0, 36
    %v699 = vld [vmem:[%s698] sm:$0x3f]
    %700 = vmatpush.msra.mxu0 %v85
    %701 = vmatpush.msra.mxu0 %v82
    %702 = vmatpush.msra.mxu0 %v79
    %703 = vmatpush.msra.mxu0 %v76
    %704 = vmatpush.msra.mxu0 %v73
    %705 = vmatpush.msra.mxu0 %v70
    %706 = vmatpush.msra.mxu0 %v67
    %707 = vmatpush.msra.mxu0 %v64
    %708 = vmatpush.msra.mxu0 %v61
    %709 = vmatpush.msra.mxu0 %v58
    %710 = vmatpush.msra.mxu0 %v55
    %711 = vmatpush.msra.mxu0 %v52
    %712 = vmatpush.msra.mxu0 %v49
    %713 = vmatpush.msra.mxu0 %v46
    %714 = vmatpush.msra.mxu0 %v43
    %715 = vmatpush.msra.mxu0 %v40
    %716 = vmatmul.f32.gmra.mxu0 %v697
    %v717 = vpop.f32.mrf.mxu0
    %v718 = vadd.f32 0.0, %v717
    %719 = vdwg.mxu0
    %720 = vmatpush.msra.mxu0 %v86
    %721 = vmatpush.msra.mxu0 %v83
    %722 = vmatpush.msra.mxu0 %v80
    %723 = vmatpush.msra.mxu0 %v77
    %724 = vmatpush.msra.mxu0 %v74
    %725 = vmatpush.msra.mxu0 %v71
    %726 = vmatpush.msra.mxu0 %v68
    %727 = vmatpush.msra.mxu0 %v65
    %728 = vmatpush.msra.mxu0 %v62
    %729 = vmatpush.msra.mxu0 %v59
    %730 = vmatpush.msra.mxu0 %v56
    %731 = vmatpush.msra.mxu0 %v53
    %732 = vmatpush.msra.mxu0 %v50
    %733 = vmatpush.msra.mxu0 %v47
    %734 = vmatpush.msra.mxu0 %v44
    %735 = vmatpush.msra.mxu0 %v41
    %736 = vmatmul.f32.gmra.mxu0 %v697
    %v737 = vpop.f32.mrf.mxu0
    %v738 = vadd.f32 0.0, %v737
    %739 = vdwg.mxu0
    %740 = vmatpush.msra.mxu0 %v87
    %741 = vmatpush.msra.mxu0 %v84
    %742 = vmatpush.msra.mxu0 %v81
    %743 = vmatpush.msra.mxu0 %v78
    %744 = vmatpush.msra.mxu0 %v75
    %745 = vmatpush.msra.mxu0 %v72
    %746 = vmatpush.msra.mxu0 %v69
    %747 = vmatpush.msra.mxu0 %v66
    %748 = vmatpush.msra.mxu0 %v63
    %749 = vmatpush.msra.mxu0 %v60
    %750 = vmatpush.msra.mxu0 %v57
    %751 = vmatpush.msra.mxu0 %v54
    %752 = vmatpush.msra.mxu0 %v51
    %753 = vmatpush.msra.mxu0 %v48
    %754 = vmatpush.msra.mxu0 %v45
    %755 = vmatpush.msra.mxu0 %v42
    %756 = vmatmul.f32.gmra.mxu0 %v697
    %v757 = vpop.f32.mrf.mxu0
    %v758 = vadd.f32 0.0, %v757
    %759 = vdwg.mxu0
    %v762 = vrot.slane %v738, 6
    %v763 = vsel %vm156, %v718, %v762
    %v765 = vadd.f32 %v699, %v763
    %v766 = vxor.u32 %v765, 2147483648
    %v767 = vmul.f32 %v766, 1.442695
    %v768 = vpow.pop %v767
    %v769 = vadd.f32 %v768, 1.0
    %v770 = vrcp.pop %v769
    %v771 = vmul.f32 %v769, %v770
    %v772 = vsub.f32 1.0, %v771
    %v773 = vmul.f32 %v770, %v772
    %v774 = vadd.f32 %v770, %v773
    %vm775 = vweird.f32 %v769
    %vm776 = vweird.f32 %v770
    %vm777 = vmor %vm775, %vm776
    %v778 = vsel %vm777, %v770, %v774
    %v779 = vand.u32 2147483647, %v769
    %vm780 = vcmp.eq.f32.partialorder %v779, 8.507059e+37
    %v781 = vand.u32 %v769, 2147483648
    %v782 = vor.u32 1.1754944e-38, %v781
    %v783 = vsel %vm780, %v782, %v778
    %v784 = vmul.f32 1.0, %v783
    %v785 = vadd.f32 %v758, %v90
    %v786 = vmul.f32 %v784, %v785
    %v788 = vrot.slane %v699, 4
    %v790 = vadd.f32 %v788, %v786
    %v791 = vtanh.pop %v790
    %v793 = vrot.slane %v784, 2
    %v795 = vsub.f32 1.0, %v793
    %v796 = vmul.f32 %v795, %v791
    %v797 = vmul.f32 %v793, %v697
    %v798 = vadd.f32 %v796, %v797
    %s799 = scalar_lea.vmem %s0, 42
    %v800 = vld [vmem:[%s799] sm:$0x3f]
    %801 = vmatpush.msra.mxu0 %v85
    %802 = vmatpush.msra.mxu0 %v82
    %803 = vmatpush.msra.mxu0 %v79
    %804 = vmatpush.msra.mxu0 %v76
    %805 = vmatpush.msra.mxu0 %v73
    %806 = vmatpush.msra.mxu0 %v70
    %807 = vmatpush.msra.mxu0 %v67
    %808 = vmatpush.msra.mxu0 %v64
    %809 = vmatpush.msra.mxu0 %v61
    %810 = vmatpush.msra.mxu0 %v58
    %811 = vmatpush.msra.mxu0 %v55
    %812 = vmatpush.msra.mxu0 %v52
    %813 = vmatpush.msra.mxu0 %v49
    %814 = vmatpush.msra.mxu0 %v46
    %815 = vmatpush.msra.mxu0 %v43
    %816 = vmatpush.msra.mxu0 %v40
    %817 = vmatmul.f32.gmra.mxu0 %v798
    %v818 = vpop.f32.mrf.mxu0
    %v819 = vadd.f32 0.0, %v818
    %820 = vdwg.mxu0
    %821 = vmatpush.msra.mxu0 %v86
    %822 = vmatpush.msra.mxu0 %v83
    %823 = vmatpush.msra.mxu0 %v80
    %824 = vmatpush.msra.mxu0 %v77
    %825 = vmatpush.msra.mxu0 %v74
    %826 = vmatpush.msra.mxu0 %v71
    %827 = vmatpush.msra.mxu0 %v68
    %828 = vmatpush.msra.mxu0 %v65
    %829 = vmatpush.msra.mxu0 %v62
    %830 = vmatpush.msra.mxu0 %v59
    %831 = vmatpush.msra.mxu0 %v56
    %832 = vmatpush.msra.mxu0 %v53
    %833 = vmatpush.msra.mxu0 %v50
    %834 = vmatpush.msra.mxu0 %v47
    %835 = vmatpush.msra.mxu0 %v44
    %836 = vmatpush.msra.mxu0 %v41
    %837 = vmatmul.f32.gmra.mxu0 %v798
    %v838 = vpop.f32.mrf.mxu0
    %v839 = vadd.f32 0.0, %v838
    %840 = vdwg.mxu0
    %841 = vmatpush.msra.mxu0 %v87
    %842 = vmatpush.msra.mxu0 %v84
    %843 = vmatpush.msra.mxu0 %v81
    %844 = vmatpush.msra.mxu0 %v78
    %845 = vmatpush.msra.mxu0 %v75
    %846 = vmatpush.msra.mxu0 %v72
    %847 = vmatpush.msra.mxu0 %v69
    %848 = vmatpush.msra.mxu0 %v66
    %849 = vmatpush.msra.mxu0 %v63
    %850 = vmatpush.msra.mxu0 %v60
    %851 = vmatpush.msra.mxu0 %v57
    %852 = vmatpush.msra.mxu0 %v54
    %853 = vmatpush.msra.mxu0 %v51
    %854 = vmatpush.msra.mxu0 %v48
    %855 = vmatpush.msra.mxu0 %v45
    %856 = vmatpush.msra.mxu0 %v42
    %857 = vmatmul.f32.gmra.mxu0 %v798
    %v858 = vpop.f32.mrf.mxu0
    %v859 = vadd.f32 0.0, %v858
    %860 = vdwg.mxu0
    %v863 = vrot.slane %v839, 6
    %v864 = vsel %vm156, %v819, %v863
    %v866 = vadd.f32 %v800, %v864
    %v867 = vxor.u32 %v866, 2147483648
    %v868 = vmul.f32 %v867, 1.442695
    %v869 = vpow.pop %v868
    %v870 = vadd.f32 %v869, 1.0
    %v871 = vrcp.pop %v870
    %v872 = vmul.f32 %v870, %v871
    %v873 = vsub.f32 1.0, %v872
    %v874 = vmul.f32 %v871, %v873
    %v875 = vadd.f32 %v871, %v874
    %vm876 = vweird.f32 %v870
    %vm877 = vweird.f32 %v871
    %vm878 = vmor %vm876, %vm877
    %v879 = vsel %vm878, %v871, %v875
    %v880 = vand.u32 2147483647, %v870
    %vm881 = vcmp.eq.f32.partialorder %v880, 8.507059e+37
    %v882 = vand.u32 %v870, 2147483648
    %v883 = vor.u32 1.1754944e-38, %v882
    %v884 = vsel %vm881, %v883, %v879
    %v885 = vmul.f32 1.0, %v884
    %v886 = vadd.f32 %v859, %v90
    %v887 = vmul.f32 %v885, %v886
    %v889 = vrot.slane %v800, 4
    %v891 = vadd.f32 %v889, %v887
    %v892 = vtanh.pop %v891
    %v894 = vrot.slane %v885, 2
    %v896 = vsub.f32 1.0, %v894
    %v897 = vmul.f32 %v896, %v892
    %v898 = vmul.f32 %v894, %v798
    %v899 = vadd.f32 %v897, %v898
    %v900 = vld [vmem:[%s3] sm:$0xff]
    %v901 = vld [vmem:[%s3 + $0x8] sm:$0xff]
    %v902 = vld [vmem:[%s3 + $0x10] sm:$0xff]
    %v903 = vld [vmem:[%s3 + $0x18] sm:$0xff]
    %v904 = vld [vmem:[%s3 + $0x20] sm:$0xff]
    %v905 = vld [vmem:[%s3 + $0x28] sm:$0xff]
    %v906 = vld [vmem:[%s3 + $0x30] sm:$0xff]
    %v907 = vld [vmem:[%s3 + $0x38] sm:$0xff]
    %v908 = vld [vmem:[%s3 + $0x40] sm:$0xff]
    %v909 = vld [vmem:[%s3 + $0x48] sm:$0xff]
    %v910 = vld [vmem:[%s3 + $0x50] sm:$0xff]
    %v911 = vld [vmem:[%s3 + $0x58] sm:$0xff]
    %v912 = vld [vmem:[%s3 + $0x60] sm:$0xff]
    %v913 = vld [vmem:[%s3 + $0x68] sm:$0xff]
    %v914 = vld [vmem:[%s3 + $0x70] sm:$0xff]
    %v915 = vld [vmem:[%s3 + $0x78] sm:$0xff]
    %v916 = vld [vmem:[%s4] sm:$0x1]
    %v918 = vperm.slane %v916, 0
    %920 = vmatpush.msra.mxu0 %v915
    %921 = vmatpush.msra.mxu0 %v914
    %922 = vmatpush.msra.mxu0 %v913
    %923 = vmatpush.msra.mxu0 %v912
    %924 = vmatpush.msra.mxu0 %v911
    %925 = vmatpush.msra.mxu0 %v910
    %926 = vmatpush.msra.mxu0 %v909
    %927 = vmatpush.msra.mxu0 %v908
    %928 = vmatpush.msra.mxu0 %v907
    %929 = vmatpush.msra.mxu0 %v906
    %930 = vmatpush.msra.mxu0 %v905
    %931 = vmatpush.msra.mxu0 %v904
    %932 = vmatpush.msra.mxu0 %v903
    %933 = vmatpush.msra.mxu0 %v902
    %934 = vmatpush.msra.mxu0 %v901
    %935 = vmatpush.msra.mxu0 %v900
    %936 = vmatmul.f32.gmra.mxu0 %v899
    %v937 = vpop.f32.mrf.mxu0
    %v938 = vadd.f32 %v918, %v937
    %939 = vdwg.mxu0
    %vm940 = vcmask 25600
    %v941 = vsel %vm940, %v938, -inf
    %942 = vmax.xlane.f32.xlu0 %v941
    %v943 = vpop.xlane.xlu0 %942
    %v944 = vsub.f32 %v938, %v943
    %v945 = vmul.f32 %v944, 1.442695
    %v946 = vpow.pop %v945
    %v947 = vsel %vm940, %v946, 0.0
    %948 = vadd.xlane.f32.xlu0 %v947
    %v949 = vpop.xlane.xlu0 %948
    %v950 = vrcp.pop %v949
    %v951 = vmul.f32 %v949, %v950
    %v952 = vsub.f32 1.0, %v951
    %v953 = vmul.f32 %v950, %v952
    %v954 = vadd.f32 %v950, %v953
    %vm955 = vweird.f32 %v949
    %vm956 = vweird.f32 %v950
    %vm957 = vmor %vm955, %vm956
    %v958 = vsel %vm957, %v950, %v954
    %v959 = vand.u32 2147483647, %v949
    %vm960 = vcmp.eq.f32.partialorder %v959, 8.507059e+37
    %v961 = vand.u32 %v949, 2147483648
    %v962 = vor.u32 1.1754944e-38, %v961
    %v963 = vsel %vm960, %v962, %v958
    %v964 = vmul.f32 %v946, %v963
    %965 = vst.msk [vmem:[#allocation5] sm:$0x3] %vm940, %v964
    %966 = vst [vmem:[#allocation6] sm:$0x3] %v899
    // Predicated region
    $region26: #{tpu_custom_call.1} parent=1 // pred_check
      _
    $region27: #{tpu_custom_call.1} parent=1 // pred_check_branch
      %968 = sbr.rel (0) target = $region29
    $region28: #{tpu_custom_call.1} parent=1 // pred_region
      %970 = vsyncadd [#allocation4], 0
      %s972 = sshll.u32 [#allocation5], 4
      %s973 = int_to_ptr.vmem [resolvable:$true] %s972
      %s974 = sshll.u32 %s5, 4
      %s975 = int_to_ptr.hbm [resolvable:$true] %s974
      %977 = dma.vmem_to_hbm [thread:$0]  %s973, 32, %s975, [#allocation4]
    $region29: #{tpu_custom_call.1} parent=1 // pred_fallthru
      _
    // Predicated region
    $region30: #{tpu_custom_call.1} parent=1 // pred_check
      _
    $region31: #{tpu_custom_call.1} parent=1 // pred_check_branch
      %979 = sbr.rel (0) target = $region33
    $region32: #{tpu_custom_call.1} parent=1 // pred_region
      %981 = vsyncadd [#allocation7], 0
      %s983 = sshll.u32 [#allocation6], 4
      %s984 = int_to_ptr.vmem [resolvable:$true] %s983
      %s985 = sshll.u32 %s6, 4
      %s986 = int_to_ptr.hbm [resolvable:$true] %s985
      %988 = dma.vmem_to_hbm [thread:$0]  %s984, 32, %s986, [#allocation7]
    $region33: #{tpu_custom_call.1} parent=1 // pred_fallthru
      _
    // Predicated region
    $region34: #{tpu_custom_call.1} parent=1 // pred_check
      _
    $region35: #{tpu_custom_call.1} parent=1 // pred_check_branch
      %990 = sbr.rel (0) target = $region37
    $region36: #{tpu_custom_call.1} parent=1 // pred_region
      %992 = dma.done [#allocation4], 32
    $region37: #{tpu_custom_call.1} parent=1 // pred_fallthru
      _
    // Predicated region
    $region38: #{tpu_custom_call.1} parent=1 // pred_check
      _
    $region39: #{tpu_custom_call.1} parent=1 // pred_check_branch
      %994 = sbr.rel (0) target = $region41
    $region40: #{tpu_custom_call.1} parent=1 // pred_region
      %996 = dma.done [#allocation7], 32
    $region41: #{tpu_custom_call.1} parent=1 // pred_fallthru
      _
    %997 = vsyncpa [#allocation3], 1
    %998 = vsyncpa [#allocation4], 1
    %999 = vsyncpa [#allocation7], 1

</llo_original>
